<compile_context>
chip_gen: v7x
topology: tpu7x:2x2x1
jax: 0.10.0
libtpu: 0.0.40
codegen_flags: <defaults>
</compile_context>

<pallas_src>
import jax
import jax.numpy as jnp
from jax.experimental import pallas as pl
from jax.experimental.pallas import tpu as pltpu

# ---- Model dimensions (Lunar Lander DQN: state=8, actions=4, hidden=64/64) --
INPUT_SIZE = 8
HIDDEN1 = 64
HIDDEN2 = 64
OUTPUT_SIZE = 4
PW = 128        # lane-padded width used for every layer inside the kernel
_MAX_TB = 512   # max batch-tile (rows per grid step)


def _round_up(n, m):
    return (n + m - 1) // m * m


# ---- Static row offsets of each parameter inside the packed slab ------------
_R_W1 = 0                                   # (INPUT_SIZE, PW)
_R_B1 = _round_up(_R_W1 + INPUT_SIZE, 8)    # (1, PW)
_R_W2 = _round_up(_R_B1 + 1, 8)             # (PW, PW)  (rows >= HIDDEN1 are zero)
_R_B2 = _round_up(_R_W2 + PW, 8)            # (1, PW)
_R_W3 = _round_up(_R_B2 + 1, 8)             # (PW, PW)  (rows >= HIDDEN2 are zero)
_R_B3 = _round_up(_R_W3 + PW, 8)            # (1, PW)
_SLAB_ROWS = _round_up(_R_B3 + 1, 8)        # 288 rows total -> 144 KiB f32


def pack_params(w1, b1, w2, b2, w3, b3):
    """Pack all parameters into one lane-padded f32 slab.

    wK: (in_k, out_k)  (already transposed vs. PyTorch's (out, in))
    bK: (out_k,)
    Zero padding in unused rows/columns is mathematically inert:
    padded hidden columns stay exactly 0 through bias+ReLU and contract
    against zero weight rows in the next layer.
    """
    slab = jnp.zeros((_SLAB_ROWS, PW), jnp.float32)
    slab = slab.at[_R_W1:_R_W1 + INPUT_SIZE, :HIDDEN1].set(w1)
    slab = slab.at[_R_B1, :HIDDEN1].set(b1)
    slab = slab.at[_R_W2:_R_W2 + HIDDEN1, :HIDDEN2].set(w2)
    slab = slab.at[_R_B2, :HIDDEN2].set(b2)
    slab = slab.at[_R_W3:_R_W3 + HIDDEN2, :OUTPUT_SIZE].set(w3)
    slab = slab.at[_R_B3, :OUTPUT_SIZE].set(b3)
    return slab


def _mlp_kernel(x_ref, p_ref, o_ref):
    # x_ref: (TB, INPUT_SIZE)   p_ref: (_SLAB_ROWS, PW) resident in VMEM
    # o_ref: (TB, PW)
    x = x_ref[...]

    # Layer 1: Linear + ReLU  (MXU matmul at lane width 128, f32 accumulation)
    w1 = p_ref[_R_W1:_R_W1 + INPUT_SIZE, :]
    b1 = p_ref[_R_B1:_R_B1 + 1, :]
    h1 = jnp.maximum(jnp.dot(x, w1, preferred_element_type=jnp.float32) + b1, 0.0)

    # Layer 2: Linear + ReLU
    w2 = p_ref[_R_W2:_R_W2 + PW, :]
    b2 = p_ref[_R_B2:_R_B2 + 1, :]
    h2 = jnp.maximum(jnp.dot(h1, w2, preferred_element_type=jnp.float32) + b2, 0.0)

    # Layer 3: Linear (no activation) -> lane-dense (TB, 128) store
    w3 = p_ref[_R_W3:_R_W3 + PW, :]
    b3 = p_ref[_R_B3:_R_B3 + 1, :]
    o_ref[...] = jnp.dot(h2, w3, preferred_element_type=jnp.float32) + b3


@jax.jit
def dnn_forward(x, slab):
    """Fused relu(Lin1) -> relu(Lin2) -> Lin3 forward.

    x:    (B, INPUT_SIZE) float32
    slab: packed parameters from pack_params()
    returns (B, OUTPUT_SIZE) float32
    """
    B = x.shape[0]

    # Batch tiling: a single grid step covers the whole batch whenever
    # round_up(B, 8) <= 512 (no per-step overhead, no padding for B % 8 == 0).
    # Larger batches pipeline in 512-row tiles across a "parallel" grid axis.
    Bp = _round_up(max(B, 1), 8)
    if Bp <= _MAX_TB:
        TB = Bp
    else:
        TB = _MAX_TB
        Bp = _round_up(Bp, TB)
    if Bp != B:
        x = jnp.pad(x, ((0, Bp - B), (0, 0)))

    # Advisory cost estimate matching the padded shapes that actually execute.
    flops = 2 * Bp * (INPUT_SIZE * PW + PW * PW + PW * PW)
    bytes_accessed = 4 * (Bp * INPUT_SIZE + _SLAB_ROWS * PW + Bp * PW)

    out = pl.pallas_call(
        _mlp_kernel,
        out_shape=jax.ShapeDtypeStruct((Bp, PW), jnp.float32),
        grid=(Bp // TB,),
        in_specs=[
            # x: tiled over batch rows, pipelined (double-buffered) by Pallas.
            pl.BlockSpec((TB, INPUT_SIZE), lambda i: (i, 0)),
            # Parameter slab: whole array resident in VMEM once, no pipeline
            # bookkeeping / double buffering for a block that never changes.
            pl.BlockSpec(memory_space=pltpu.MemorySpace.VMEM),
        ],
        out_specs=pl.BlockSpec((TB, PW), lambda i: (i, 0)),
        compiler_params=pltpu.CompilerParams(
            dimension_semantics=("parallel",)),
        cost_estimate=pl.CostEstimate(
            flops=flops, transcendentals=0, bytes_accessed=bytes_accessed),
    )(x, slab)

    # Slice the 4 valid Q-value columns (rest of the 128-lane block is padding).
    return out[:B, :OUTPUT_SIZE]


def init_linear_params(key, in_features, out_features):
    """PyTorch-style init U(-1/sqrt(fan_in), 1/sqrt(fan_in)).

    Weight returned pre-transposed to (in_features, out_features); bias (out,).
    """
    kw, kb = jax.random.split(key)
    bound = 1.0 / jnp.sqrt(jnp.float32(in_features))
    w = jax.random.uniform(kw, (in_features, out_features), jnp.float32, -bound, bound)
    b = jax.random.uniform(kb, (out_features,), jnp.float32, -bound, bound)
    return w, b


def _reference(x, w1, b1, w2, b2, w3, b3):
    h = jnp.maximum(x @ w1 + b1, 0.0)
    h = jnp.maximum(h @ w2 + b2, 0.0)
    return h @ w3 + b3


if __name__ == "__main__":
    root = jax.random.PRNGKey(0)
    k_x1, k_x2, k_x3, k1, k2, k3 = jax.random.split(root, 6)

    w1, b1 = init_linear_params(k1, INPUT_SIZE, HIDDEN1)
    w2, b2 = init_linear_params(k2, HIDDEN1, HIDDEN2)
    w3, b3 = init_linear_params(k3, HIDDEN2, OUTPUT_SIZE)
    slab = pack_params(w1, b1, w2, b2, w3, b3)

    # Case 1: replay-batch style input (single grid step, TB = 200, no padding).
    x_big = jax.random.normal(k_x1, (200, INPUT_SIZE), jnp.float32)
    out_big = jax.block_until_ready(dnn_forward(x_big, slab))
    ref_big = _reference(x_big, w1, b1, w2, b2, w3, b3)
    assert out_big.shape == (200, OUTPUT_SIZE)
    assert jnp.allclose(out_big, ref_big, atol=1e-5, rtol=1e-5)

    # Case 2: tiny ragged batch (exercises the row-padding path).
    x_small = jax.random.normal(k_x2, (5, INPUT_SIZE), jnp.float32)
    out_small = jax.block_until_ready(dnn_forward(x_small, slab))
    ref_small = _reference(x_small, w1, b1, w2, b2, w3, b3)
    assert out_small.shape == (5, OUTPUT_SIZE)
    assert jnp.allclose(out_small, ref_small, atol=1e-5, rtol=1e-5)

    # Case 3: large batch (exercises the multi-tile pipelined "parallel" grid).
    x_huge = jax.random.normal(k_x3, (1000, INPUT_SIZE), jnp.float32)
    out_huge = jax.block_until_ready(dnn_forward(x_huge, slab))
    ref_huge = _reference(x_huge, w1, b1, w2, b2, w3, b3)
    assert out_huge.shape == (1000, OUTPUT_SIZE)
    assert jnp.allclose(out_huge, ref_huge, atol=1e-5, rtol=1e-5)

    print("KERNEL_OK")
</pallas_src>

<mosaic_0001>
module attributes {stable_mosaic.version = 11 : i64} {
  func.func @_mlp_kernel(%arg0: i32, %arg1: memref<200x8xf32, #tpu.memory_space<vmem>>, %arg2: memref<288x128xf32, #tpu.memory_space<vmem>>, %arg3: memref<200x128xf32, #tpu.memory_space<vmem>>) attributes {dimension_semantics = [#tpu.dimension_semantics<parallel>], iteration_bounds = array<i64: 1>, scalar_prefetch = 0 : i64, scratch_operands = 0 : i64, tpu.core_type = #tpu.core_type<tc>, window_params = [{transform_indices = @transform_0, window_bounds = array<i64: 200, 8>}, {pipeline_mode = #tpu.pipeline_mode<synchronous>, transform_indices = @transform_1, window_bounds = array<i64: 288, 128>}, {transform_indices = @transform_2, window_bounds = array<i64: 200, 128>}]} {
    %c0 = arith.constant 0 : index
    %c0_0 = arith.constant 0 : index
    %0 = vector.load %arg1[%c0, %c0_0] : memref<200x8xf32, #tpu.memory_space<vmem>>, vector<200x8xf32>
    %c0_1 = arith.constant 0 : index
    %c0_2 = arith.constant 0 : index
    %1 = vector.load %arg2[%c0_1, %c0_2] : memref<288x128xf32, #tpu.memory_space<vmem>>, vector<8x128xf32>
    %c8 = arith.constant 8 : index
    %c0_3 = arith.constant 0 : index
    %2 = vector.load %arg2[%c8, %c0_3] : memref<288x128xf32, #tpu.memory_space<vmem>>, vector<1x128xf32>
    %cst = arith.constant dense<0.000000e+00> : vector<200x128xf32>
    %3 = tpu.matmul %0, %1, %cst {dimension_numbers = #tpu.dot_dimension_numbers<[1], [0], [0], [1], [0, 0, 1, 1], [], []>} : vector<200x8xf32>, vector<8x128xf32>, vector<200x128xf32> -> vector<200x128xf32>
    %4 = vector.broadcast %2 : vector<1x128xf32> to vector<200x128xf32>
    %5 = arith.addf %3, %4 : vector<200x128xf32>
    %cst_4 = arith.constant 0.000000e+00 : f32
    %6 = vector.broadcast %cst_4 : f32 to vector<200x128xf32>
    %7 = arith.maximumf %5, %6 : vector<200x128xf32>
    %c16 = arith.constant 16 : index
    %c0_5 = arith.constant 0 : index
    %8 = vector.load %arg2[%c16, %c0_5] : memref<288x128xf32, #tpu.memory_space<vmem>>, vector<128x128xf32>
    %c144 = arith.constant 144 : index
    %c0_6 = arith.constant 0 : index
    %9 = vector.load %arg2[%c144, %c0_6] : memref<288x128xf32, #tpu.memory_space<vmem>>, vector<1x128xf32>
    %cst_7 = arith.constant dense<0.000000e+00> : vector<200x128xf32>
    %10 = tpu.matmul %7, %8, %cst_7 {dimension_numbers = #tpu.dot_dimension_numbers<[1], [0], [0], [1], [0, 0, 1, 1], [], []>} : vector<200x128xf32>, vector<128x128xf32>, vector<200x128xf32> -> vector<200x128xf32>
    %11 = vector.broadcast %9 : vector<1x128xf32> to vector<200x128xf32>
    %12 = arith.addf %10, %11 : vector<200x128xf32>
    %cst_8 = arith.constant 0.000000e+00 : f32
    %13 = vector.broadcast %cst_8 : f32 to vector<200x128xf32>
    %14 = arith.maximumf %12, %13 : vector<200x128xf32>
    %c152 = arith.constant 152 : index
    %c0_9 = arith.constant 0 : index
    %15 = vector.load %arg2[%c152, %c0_9] : memref<288x128xf32, #tpu.memory_space<vmem>>, vector<128x128xf32>
    %c280 = arith.constant 280 : index
    %c0_10 = arith.constant 0 : index
    %16 = vector.load %arg2[%c280, %c0_10] : memref<288x128xf32, #tpu.memory_space<vmem>>, vector<1x128xf32>
    %cst_11 = arith.constant dense<0.000000e+00> : vector<200x128xf32>
    %17 = tpu.matmul %14, %15, %cst_11 {dimension_numbers = #tpu.dot_dimension_numbers<[1], [0], [0], [1], [0, 0, 1, 1], [], []>} : vector<200x128xf32>, vector<128x128xf32>, vector<200x128xf32> -> vector<200x128xf32>
    %18 = vector.broadcast %16 : vector<1x128xf32> to vector<200x128xf32>
    %19 = arith.addf %17, %18 : vector<200x128xf32>
    %c0_12 = arith.constant 0 : index
    %c0_13 = arith.constant 0 : index
    %20 = vector.load %arg3[%c0_12, %c0_13] : memref<200x128xf32, #tpu.memory_space<vmem>>, vector<200x128xf32>
    tpu.vector_store %arg3[%c0_12, %c0_13], %19 {strides = array<i32>} : memref<200x128xf32, #tpu.memory_space<vmem>>, vector<200x128xf32>,
    return
  }
  func.func @transform_0(%arg0: i32) -> (i32, i32) {
    %c0_i32 = arith.constant 0 : i32
    %c0_i32_0 = arith.constant 0 : i32
    return %arg0, %c0_i32 : i32, i32
  }
  func.func @transform_1(%arg0: i32) -> (i32, i32) {
    %c0_i32 = arith.constant 0 : i32
    %c0_i32_0 = arith.constant 0 : i32
    %c0_i32_1 = arith.constant 0 : i32
    return %c0_i32, %c0_i32_0 : i32, i32
  }
  func.func @transform_2(%arg0: i32) -> (i32, i32) {
    %c0_i32 = arith.constant 0 : i32
    %c0_i32_0 = arith.constant 0 : i32
    return %arg0, %c0_i32 : i32, i32
  }
}

</mosaic_0001>

<llo_original>
// kernel: dnn_forward.1
$region0: #{dnn_forward.1}
  #allocation0 [shape = 'u32[]', space=smem, size = 0x4, offset = 0x4, fixed_abs, tag = 'smem constant byte address 0x4 - core index']
  #allocation1 [shape = 'u32[144,128]{1,0:T(1,128)}', space=vmem, size = 0x12000, scoped, tag = 'internal scratch']
  %s0 = inlined_call_operand.vmem [shape: f32[200,8], index: 0, kind: input, shape index: {}]
  %s1 = inlined_call_operand.hbm [shape: f32[288,128], index: 1, kind: input, shape index: {}]
  %s2 = inlined_call_operand.vmem [shape: f32[200,128], index: 2, kind: output, shape index: {}]
  %s3 = sld [smem:[#allocation0]]
  $region22: #{dnn_forward.1} parent=0
    _
  %s5 = ssub.s32 1, %s3
  %s6 = scalar_select 0, %s5, %s3
  $region1: #{dnn_forward.1} parent=0
    #allocation2 [shape = 'u8[147456]{0}', space=vmem, size = 0x24000, scoped, tag = 'input window, operand 1, single buffered']
    #allocation3 [shape = 's32[1]{0}', space=sflag, size = 0x4, scoped, tag = 'scoped memory for dnn_forward.1']
    %7 = vsyncpa [#allocation3], 0
    // Predicated region
    $region2: #{dnn_forward.1} parent=1 // pred_check
      _
    $region3: #{dnn_forward.1} parent=1 // pred_check_branch
      %9 = sbr.rel (0) target = $region5
    $region4: #{dnn_forward.1} parent=1 // pred_region
      _
    $region5: #{dnn_forward.1} parent=1 // pred_fallthru
      _
    // Predicated region
    $region6: #{dnn_forward.1} parent=1 // pred_check
      _
    $region7: #{dnn_forward.1} parent=1 // pred_check_branch
      %11 = sbr.rel (0) target = $region9
    $region8: #{dnn_forward.1} parent=1 // pred_region
      %s13 = ssub.s32 4608, 4608
      %14 = vsyncadd [#allocation3], %s13
      %s15 = sshll.u32 [#allocation2], 4
      %s16 = int_to_ptr.vmem [resolvable:$true] %s15
      %21 = dma.hbm_to_vmem [thread:$0]  %s1, 4608, %s16, [#allocation3], 128, 128, 8
    $region9: #{dnn_forward.1} parent=1 // pred_fallthru
      _
    // Predicated region
    $region10: #{dnn_forward.1} parent=1 // pred_check
      _
    $region11: #{dnn_forward.1} parent=1 // pred_check_branch
      %23 = sbr.rel (0) target = $region13
    $region12: #{dnn_forward.1} parent=1 // pred_region
      %24 = dma.done [#allocation3], 4608
    $region13: #{dnn_forward.1} parent=1 // pred_fallthru
      _
    %v25 = vld [vmem:[%s0] sm:$0xff]
    %v26 = vld [vmem:[%s0 + $0x8] sm:$0xff]
    %v27 = vld [vmem:[%s0 + $0x10] sm:$0xff]
    %v28 = vld [vmem:[%s0 + $0x18] sm:$0xff]
    %v29 = vld [vmem:[%s0 + $0x20] sm:$0xff]
    %v30 = vld [vmem:[%s0 + $0x28] sm:$0xff]
    %v31 = vld [vmem:[%s0 + $0x30] sm:$0xff]
    %v32 = vld [vmem:[%s0 + $0x38] sm:$0xff]
    %v33 = vld [vmem:[%s0 + $0x40] sm:$0xff]
    %v34 = vld [vmem:[%s0 + $0x48] sm:$0xff]
    %v35 = vld [vmem:[%s0 + $0x50] sm:$0xff]
    %v36 = vld [vmem:[%s0 + $0x58] sm:$0xff]
    %v37 = vld [vmem:[%s0 + $0x60] sm:$0xff]
    %v38 = vld [vmem:[%s0 + $0x68] sm:$0xff]
    %v39 = vld [vmem:[%s0 + $0x70] sm:$0xff]
    %v40 = vld [vmem:[%s0 + $0x78] sm:$0xff]
    %v41 = vld [vmem:[%s0 + $0x80] sm:$0xff]
    %v42 = vld [vmem:[%s0 + $0x88] sm:$0xff]
    %v43 = vld [vmem:[%s0 + $0x90] sm:$0xff]
    %v44 = vld [vmem:[%s0 + $0x98] sm:$0xff]
    %v45 = vld [vmem:[%s0 + $0xa0] sm:$0xff]
    %v46 = vld [vmem:[%s0 + $0xa8] sm:$0xff]
    %v47 = vld [vmem:[%s0 + $0xb0] sm:$0xff]
    %v48 = vld [vmem:[%s0 + $0xb8] sm:$0xff]
    %v49 = vld [vmem:[%s0 + $0xc0] sm:$0xff]
    %v50 = vld [vmem:[#allocation2] sm:$0xff]
    %v51 = vld [vmem:[#allocation2 + $0x8] sm:$0x1]
    %v52 = vlaneseq
    %v53 = vshrl.u32 %v52, 7
    %v54 = vsub.s32 0, %v53
    %v55 = vrot.slane %v51, %v54
    %vm56 = vcmask 64512
    %v58 = vsel %vm56, %v25, 0
    %v61 = vsel %vm56, %v26, 0
    %v64 = vsel %vm56, %v27, 0
    %v67 = vsel %vm56, %v28, 0
    %v70 = vsel %vm56, %v29, 0
    %v73 = vsel %vm56, %v30, 0
    %v76 = vsel %vm56, %v31, 0
    %v79 = vsel %vm56, %v32, 0
    %v82 = vsel %vm56, %v33, 0
    %v85 = vsel %vm56, %v34, 0
    %v88 = vsel %vm56, %v35, 0
    %v91 = vsel %vm56, %v36, 0
    %v94 = vsel %vm56, %v37, 0
    %v97 = vsel %vm56, %v38, 0
    %v100 = vsel %vm56, %v39, 0
    %v103 = vsel %vm56, %v40, 0
    %v106 = vsel %vm56, %v41, 0
    %v109 = vsel %vm56, %v42, 0
    %v112 = vsel %vm56, %v43, 0
    %v115 = vsel %vm56, %v44, 0
    %v118 = vsel %vm56, %v45, 0
    %v121 = vsel %vm56, %v46, 0
    %v124 = vsel %vm56, %v47, 0
    %v127 = vsel %vm56, %v48, 0
    %v130 = vsel %vm56, %v49, 0
    %132 = vmatprep.subr.mxu0 0.0
    %133 = vmatpush1.msra.mxu0 %v50
    %134 = vmatprep.subr.mxu0 0.0
    %135 = vmatpush1.msra.mxu0 0.0
    %136 = vmatprep.subr.mxu0 0.0
    %137 = vmatpush1.msra.mxu0 0.0
    %138 = vmatprep.subr.mxu0 0.0
    %139 = vmatpush1.msra.mxu0 0.0
    %140 = vmatprep.subr.mxu0 0.0
    %141 = vmatpush1.msra.mxu0 0.0
    %142 = vmatprep.subr.mxu0 0.0
    %143 = vmatpush1.msra.mxu0 0.0
    %144 = vmatprep.subr.mxu0 0.0
    %145 = vmatpush1.msra.mxu0 0.0
    %146 = vmatprep.subr.mxu0 0.0
    %147 = vmatpush1.msra.mxu0 0.0
    %148 = vmatprep.subr.mxu0 0.0
    %149 = vmatpush1.msra.mxu0 0.0
    %150 = vmatprep.subr.mxu0 0.0
    %151 = vmatpush1.msra.mxu0 0.0
    %152 = vmatprep.subr.mxu0 0.0
    %153 = vmatpush1.msra.mxu0 0.0
    %154 = vmatprep.subr.mxu0 0.0
    %155 = vmatpush1.msra.mxu0 0.0
    %156 = vmatprep.subr.mxu0 0.0
    %157 = vmatpush1.msra.mxu0 0.0
    %158 = vmatprep.subr.mxu0 0.0
    %159 = vmatpush1.msra.mxu0 0.0
    %160 = vmatprep.subr.mxu0 0.0
    %161 = vmatpush1.msra.mxu0 0.0
    %162 = vmatprep.subr.mxu0 0.0
    %163 = vmatpush1.msra.mxu0 0.0
    %164 = vmatprep.subr.mxu0 0.0
    %165 = vmatpush1.msra.mxu0 0.0
    %166 = vmatprep.subr.mxu0 0.0
    %167 = vmatpush1.msra.mxu0 0.0
    %168 = vmatprep.subr.mxu0 0.0
    %169 = vmatpush1.msra.mxu0 0.0
    %170 = vmatprep.subr.mxu0 0.0
    %171 = vmatpush1.msra.mxu0 0.0
    %172 = vmatprep.subr.mxu0 0.0
    %173 = vmatpush1.msra.mxu0 0.0
    %174 = vmatprep.subr.mxu0 0.0
    %175 = vmatpush1.msra.mxu0 0.0
    %176 = vmatprep.subr.mxu0 0.0
    %177 = vmatpush1.msra.mxu0 0.0
    %178 = vmatprep.subr.mxu0 0.0
    %179 = vmatpush1.msra.mxu0 0.0
    %180 = vmatprep.subr.mxu0 0.0
    %181 = vmatpush1.msra.mxu0 0.0
    %182 = vmatprep.subr.mxu0 0.0
    %183 = vmatpush1.msra.mxu0 0.0
    %184 = vmatprep.subr.mxu0 0.0
    %185 = vmatpush1.msra.mxu0 0.0
    %186 = vmatprep.subr.mxu0 0.0
    %187 = vmatpush1.msra.mxu0 0.0
    %188 = vmatprep.subr.mxu0 0.0
    %189 = vmatpush1.msra.mxu0 0.0
    %190 = vmatprep.subr.mxu0 0.0
    %191 = vmatpush1.msra.mxu0 0.0
    %192 = vmatprep.subr.mxu0 0.0
    %193 = vmatpush1.msra.mxu0 0.0
    %194 = vmatprep.subr.mxu0 0.0
    %195 = vmatpush1.msra.mxu0 0.0
    %196 = vmatprep.mubr.f32.mxu0 0.0
    %197 = vmatmul.mubr.f32.gmra.mrb[0].mxu0 %v58
    %v198 = vpop.f32.mrb[0].mxu0
    %v199 = vadd.f32 %v55, %v198
    %v200 = vpop.f32.mrb[0].mxu0
    %201 = vmatprep.mubr.f32.mxu0 0.0
    %202 = vmatmul.mubr.f32.gmra.mrb[0].mxu0 %v61
    %v203 = vpop.f32.mrb[0].mxu0
    %v204 = vadd.f32 %v55, %v203
    %v205 = vpop.f32.mrb[0].mxu0
    %206 = vmatprep.mubr.f32.mxu0 0.0
    %207 = vmatmul.mubr.f32.gmra.mrb[0].mxu0 %v64
    %v208 = vpop.f32.mrb[0].mxu0
    %v209 = vadd.f32 %v55, %v208
    %v210 = vpop.f32.mrb[0].mxu0
    %211 = vmatprep.mubr.f32.mxu0 0.0
    %212 = vmatmul.mubr.f32.gmra.mrb[0].mxu0 %v67
    %v213 = vpop.f32.mrb[0].mxu0
    %v214 = vadd.f32 %v55, %v213
    %v215 = vpop.f32.mrb[0].mxu0
    %216 = vmatprep.mubr.f32.mxu0 0.0
    %217 = vmatmul.mubr.f32.gmra.mrb[0].mxu0 %v70
    %v218 = vpop.f32.mrb[0].mxu0
    %v219 = vadd.f32 %v55, %v218
    %v220 = vpop.f32.mrb[0].mxu0
    %221 = vmatprep.mubr.f32.mxu0 0.0
    %222 = vmatmul.mubr.f32.gmra.mrb[0].mxu0 %v73
    %v223 = vpop.f32.mrb[0].mxu0
    %v224 = vadd.f32 %v55, %v223
    %v225 = vpop.f32.mrb[0].mxu0
    %226 = vmatprep.mubr.f32.mxu0 0.0
    %227 = vmatmul.mubr.f32.gmra.mrb[0].mxu0 %v76
    %v228 = vpop.f32.mrb[0].mxu0
    %v229 = vadd.f32 %v55, %v228
    %v230 = vpop.f32.mrb[0].mxu0
    %231 = vmatprep.mubr.f32.mxu0 0.0
    %232 = vmatmul.mubr.f32.gmra.mrb[0].mxu0 %v79
    %v233 = vpop.f32.mrb[0].mxu0
    %v234 = vadd.f32 %v55, %v233
    %v235 = vpop.f32.mrb[0].mxu0
    %236 = vmatprep.mubr.f32.mxu0 0.0
    %237 = vmatmul.mubr.f32.gmra.mrb[0].mxu0 %v82
    %v238 = vpop.f32.mrb[0].mxu0
    %v239 = vadd.f32 %v55, %v238
    %v240 = vpop.f32.mrb[0].mxu0
    %241 = vmatprep.mubr.f32.mxu0 0.0
    %242 = vmatmul.mubr.f32.gmra.mrb[0].mxu0 %v85
    %v243 = vpop.f32.mrb[0].mxu0
    %v244 = vadd.f32 %v55, %v243
    %v245 = vpop.f32.mrb[0].mxu0
    %246 = vmatprep.mubr.f32.mxu0 0.0
    %247 = vmatmul.mubr.f32.gmra.mrb[0].mxu0 %v88
    %v248 = vpop.f32.mrb[0].mxu0
    %v249 = vadd.f32 %v55, %v248
    %v250 = vpop.f32.mrb[0].mxu0
    %251 = vmatprep.mubr.f32.mxu0 0.0
    %252 = vmatmul.mubr.f32.gmra.mrb[0].mxu0 %v91
    %v253 = vpop.f32.mrb[0].mxu0
    %v254 = vadd.f32 %v55, %v253
    %v255 = vpop.f32.mrb[0].mxu0
    %256 = vmatprep.mubr.f32.mxu0 0.0
    %257 = vmatmul.mubr.f32.gmra.mrb[0].mxu0 %v94
    %v258 = vpop.f32.mrb[0].mxu0
    %v259 = vadd.f32 %v55, %v258
    %v260 = vpop.f32.mrb[0].mxu0
    %261 = vmatprep.mubr.f32.mxu0 0.0
    %262 = vmatmul.mubr.f32.gmra.mrb[0].mxu0 %v97
    %v263 = vpop.f32.mrb[0].mxu0
    %v264 = vadd.f32 %v55, %v263
    %v265 = vpop.f32.mrb[0].mxu0
    %266 = vmatprep.mubr.f32.mxu0 0.0
    %267 = vmatmul.mubr.f32.gmra.mrb[0].mxu0 %v100
    %v268 = vpop.f32.mrb[0].mxu0
    %v269 = vadd.f32 %v55, %v268
    %v270 = vpop.f32.mrb[0].mxu0
    %271 = vmatprep.mubr.f32.mxu0 0.0
    %272 = vmatmul.mubr.f32.gmra.mrb[0].mxu0 %v103
    %v273 = vpop.f32.mrb[0].mxu0
    %v274 = vadd.f32 %v55, %v273
    %v275 = vpop.f32.mrb[0].mxu0
    %276 = vmatprep.mubr.f32.mxu0 0.0
    %277 = vmatmul.mubr.f32.gmra.mrb[0].mxu0 %v106
    %v278 = vpop.f32.mrb[0].mxu0
    %v279 = vadd.f32 %v55, %v278
    %v280 = vpop.f32.mrb[0].mxu0
    %281 = vmatprep.mubr.f32.mxu0 0.0
    %282 = vmatmul.mubr.f32.gmra.mrb[0].mxu0 %v109
    %v283 = vpop.f32.mrb[0].mxu0
    %v284 = vadd.f32 %v55, %v283
    %v285 = vpop.f32.mrb[0].mxu0
    %286 = vmatprep.mubr.f32.mxu0 0.0
    %287 = vmatmul.mubr.f32.gmra.mrb[0].mxu0 %v112
    %v288 = vpop.f32.mrb[0].mxu0
    %v289 = vadd.f32 %v55, %v288
    %v290 = vpop.f32.mrb[0].mxu0
    %291 = vmatprep.mubr.f32.mxu0 0.0
    %292 = vmatmul.mubr.f32.gmra.mrb[0].mxu0 %v115
    %v293 = vpop.f32.mrb[0].mxu0
    %v294 = vadd.f32 %v55, %v293
    %v295 = vpop.f32.mrb[0].mxu0
    %296 = vmatprep.mubr.f32.mxu0 0.0
    %297 = vmatmul.mubr.f32.gmra.mrb[0].mxu0 %v118
    %v298 = vpop.f32.mrb[0].mxu0
    %v299 = vadd.f32 %v55, %v298
    %v300 = vpop.f32.mrb[0].mxu0
    %301 = vmatprep.mubr.f32.mxu0 0.0
    %302 = vmatmul.mubr.f32.gmra.mrb[0].mxu0 %v121
    %v303 = vpop.f32.mrb[0].mxu0
    %v304 = vadd.f32 %v55, %v303
    %v305 = vpop.f32.mrb[0].mxu0
    %306 = vmatprep.mubr.f32.mxu0 0.0
    %307 = vmatmul.mubr.f32.gmra.mrb[0].mxu0 %v124
    %v308 = vpop.f32.mrb[0].mxu0
    %v309 = vadd.f32 %v55, %v308
    %v310 = vpop.f32.mrb[0].mxu0
    %311 = vmatprep.mubr.f32.mxu0 0.0
    %312 = vmatmul.mubr.f32.gmra.mrb[0].mxu0 %v127
    %v313 = vpop.f32.mrb[0].mxu0
    %v314 = vadd.f32 %v55, %v313
    %v315 = vpop.f32.mrb[0].mxu0
    %316 = vmatprep.mubr.f32.mxu0 0.0
    %317 = vmatmul.mubr.f32.gmra.mrb[0].mxu0 %v130
    %v318 = vpop.f32.mrb[0].mxu0
    %v319 = vadd.f32 %v55, %v318
    %v320 = vpop.f32.mrb[0].mxu0
    %321 = vdwg.mxu0
    %v322 = vmax.f32 %v199, 0.0
    %v323 = vmax.f32 %v204, 0.0
    %v324 = vmax.f32 %v209, 0.0
    %v325 = vmax.f32 %v214, 0.0
    %v326 = vmax.f32 %v219, 0.0
    %v327 = vmax.f32 %v224, 0.0
    %v328 = vmax.f32 %v229, 0.0
    %v329 = vmax.f32 %v234, 0.0
    %v330 = vmax.f32 %v239, 0.0
    %v331 = vmax.f32 %v244, 0.0
    %v332 = vmax.f32 %v249, 0.0
    %v333 = vmax.f32 %v254, 0.0
    %v334 = vmax.f32 %v259, 0.0
    %v335 = vmax.f32 %v264, 0.0
    %v336 = vmax.f32 %v269, 0.0
    %v337 = vmax.f32 %v274, 0.0
    %v338 = vmax.f32 %v279, 0.0
    %v339 = vmax.f32 %v284, 0.0
    %v340 = vmax.f32 %v289, 0.0
    %v341 = vmax.f32 %v294, 0.0
    %v342 = vmax.f32 %v299, 0.0
    %v343 = vmax.f32 %v304, 0.0
    %v344 = vmax.f32 %v309, 0.0
    %v345 = vmax.f32 %v314, 0.0
    %v346 = vmax.f32 %v319, 0.0
    %v347 = vld [vmem:[#allocation2 + $0x10] sm:$0xff]
    %v348 = vld [vmem:[#allocation2 + $0x18] sm:$0xff]
    %v349 = vld [vmem:[#allocation2 + $0x20] sm:$0xff]
    %v350 = vld [vmem:[#allocation2 + $0x28] sm:$0xff]
    %v351 = vld [vmem:[#allocation2 + $0x30] sm:$0xff]
    %v352 = vld [vmem:[#allocation2 + $0x38] sm:$0xff]
    %v353 = vld [vmem:[#allocation2 + $0x40] sm:$0xff]
    %v354 = vld [vmem:[#allocation2 + $0x48] sm:$0xff]
    %v355 = vld [vmem:[#allocation2 + $0x50] sm:$0xff]
    %v356 = vld [vmem:[#allocation2 + $0x58] sm:$0xff]
    %v357 = vld [vmem:[#allocation2 + $0x60] sm:$0xff]
    %v358 = vld [vmem:[#allocation2 + $0x68] sm:$0xff]
    %v359 = vld [vmem:[#allocation2 + $0x70] sm:$0xff]
    %v360 = vld [vmem:[#allocation2 + $0x78] sm:$0xff]
    %v361 = vld [vmem:[#allocation2 + $0x80] sm:$0xff]
    %v362 = vld [vmem:[#allocation2 + $0x88] sm:$0xff]
    %v363 = vld [vmem:[#allocation2 + $0x90] sm:$0x1]
    %v364 = vlaneseq
    %v365 = vshrl.u32 %v364, 7
    %v366 = vsub.s32 0, %v365
    %v367 = vrot.slane %v363, %v366
    %368 = vmatprep.subr.mxu0 0.0
    %369 = vmatpush1.msra.mxu0 %v347
    %370 = vmatprep.subr.mxu0 0.0
    %371 = vmatpush1.msra.mxu0 %v348
    %372 = vmatprep.subr.mxu0 0.0
    %373 = vmatpush1.msra.mxu0 %v349
    %374 = vmatprep.subr.mxu0 0.0
    %375 = vmatpush1.msra.mxu0 %v350
    %376 = vmatprep.subr.mxu0 0.0
    %377 = vmatpush1.msra.mxu0 %v351
    %378 = vmatprep.subr.mxu0 0.0
    %379 = vmatpush1.msra.mxu0 %v352
    %380 = vmatprep.subr.mxu0 0.0
    %381 = vmatpush1.msra.mxu0 %v353
    %382 = vmatprep.subr.mxu0 0.0
    %383 = vmatpush1.msra.mxu0 %v354
    %384 = vmatprep.subr.mxu0 0.0
    %385 = vmatpush1.msra.mxu0 %v355
    %386 = vmatprep.subr.mxu0 0.0
    %387 = vmatpush1.msra.mxu0 %v356
    %388 = vmatprep.subr.mxu0 0.0
    %389 = vmatpush1.msra.mxu0 %v357
    %390 = vmatprep.subr.mxu0 0.0
    %391 = vmatpush1.msra.mxu0 %v358
    %392 = vmatprep.subr.mxu0 0.0
    %393 = vmatpush1.msra.mxu0 %v359
    %394 = vmatprep.subr.mxu0 0.0
    %395 = vmatpush1.msra.mxu0 %v360
    %396 = vmatprep.subr.mxu0 0.0
    %397 = vmatpush1.msra.mxu0 %v361
    %398 = vmatprep.subr.mxu0 0.0
    %399 = vmatpush1.msra.mxu0 %v362
    %400 = vmatprep.subr.mxu0 0.0
    %401 = vmatpush1.msra.mxu0 0.0
    %402 = vmatprep.subr.mxu0 0.0
    %403 = vmatpush1.msra.mxu0 0.0
    %404 = vmatprep.subr.mxu0 0.0
    %405 = vmatpush1.msra.mxu0 0.0
    %406 = vmatprep.subr.mxu0 0.0
    %407 = vmatpush1.msra.mxu0 0.0
    %408 = vmatprep.subr.mxu0 0.0
    %409 = vmatpush1.msra.mxu0 0.0
    %410 = vmatprep.subr.mxu0 0.0
    %411 = vmatpush1.msra.mxu0 0.0
    %412 = vmatprep.subr.mxu0 0.0
    %413 = vmatpush1.msra.mxu0 0.0
    %414 = vmatprep.subr.mxu0 0.0
    %415 = vmatpush1.msra.mxu0 0.0
    %416 = vmatprep.subr.mxu0 0.0
    %417 = vmatpush1.msra.mxu0 0.0
    %418 = vmatprep.subr.mxu0 0.0
    %419 = vmatpush1.msra.mxu0 0.0
    %420 = vmatprep.subr.mxu0 0.0
    %421 = vmatpush1.msra.mxu0 0.0
    %422 = vmatprep.subr.mxu0 0.0
    %423 = vmatpush1.msra.mxu0 0.0
    %424 = vmatprep.subr.mxu0 0.0
    %425 = vmatpush1.msra.mxu0 0.0
    %426 = vmatprep.subr.mxu0 0.0
    %427 = vmatpush1.msra.mxu0 0.0
    %428 = vmatprep.subr.mxu0 0.0
    %429 = vmatpush1.msra.mxu0 0.0
    %430 = vmatprep.subr.mxu0 0.0
    %431 = vmatpush1.msra.mxu0 0.0
    %432 = vmatprep.mubr.f32.mxu0 0.0
    %433 = vmatmul.mubr.f32.gmra.mrb[0].mxu0 %v322
    %v434 = vpop.f32.mrb[0].mxu0
    %v435 = vadd.f32 %v367, %v434
    %v436 = vpop.f32.mrb[0].mxu0
    %437 = vmatprep.mubr.f32.mxu0 0.0
    %438 = vmatmul.mubr.f32.gmra.mrb[0].mxu0 %v323
    %v439 = vpop.f32.mrb[0].mxu0
    %v440 = vadd.f32 %v367, %v439
    %v441 = vpop.f32.mrb[0].mxu0
    %442 = vmatprep.mubr.f32.mxu0 0.0
    %443 = vmatmul.mubr.f32.gmra.mrb[0].mxu0 %v324
    %v444 = vpop.f32.mrb[0].mxu0
    %v445 = vadd.f32 %v367, %v444
    %v446 = vpop.f32.mrb[0].mxu0
    %447 = vmatprep.mubr.f32.mxu0 0.0
    %448 = vmatmul.mubr.f32.gmra.mrb[0].mxu0 %v325
    %v449 = vpop.f32.mrb[0].mxu0
    %v450 = vadd.f32 %v367, %v449
    %v451 = vpop.f32.mrb[0].mxu0
    %452 = vmatprep.mubr.f32.mxu0 0.0
    %453 = vmatmul.mubr.f32.gmra.mrb[0].mxu0 %v326
    %v454 = vpop.f32.mrb[0].mxu0
    %v455 = vadd.f32 %v367, %v454
    %v456 = vpop.f32.mrb[0].mxu0
    %457 = vmatprep.mubr.f32.mxu0 0.0
    %458 = vmatmul.mubr.f32.gmra.mrb[0].mxu0 %v327
    %v459 = vpop.f32.mrb[0].mxu0
    %v460 = vadd.f32 %v367, %v459
    %v461 = vpop.f32.mrb[0].mxu0
    %462 = vmatprep.mubr.f32.mxu0 0.0
    %463 = vmatmul.mubr.f32.gmra.mrb[0].mxu0 %v328
    %v464 = vpop.f32.mrb[0].mxu0
    %v465 = vadd.f32 %v367, %v464
    %v466 = vpop.f32.mrb[0].mxu0
    %467 = vmatprep.mubr.f32.mxu0 0.0
    %468 = vmatmul.mubr.f32.gmra.mrb[0].mxu0 %v329
    %v469 = vpop.f32.mrb[0].mxu0
    %v470 = vadd.f32 %v367, %v469
    %v471 = vpop.f32.mrb[0].mxu0
    %472 = vmatprep.mubr.f32.mxu0 0.0
    %473 = vmatmul.mubr.f32.gmra.mrb[0].mxu0 %v330
    %v474 = vpop.f32.mrb[0].mxu0
    %v475 = vadd.f32 %v367, %v474
    %v476 = vpop.f32.mrb[0].mxu0
    %477 = vmatprep.mubr.f32.mxu0 0.0
    %478 = vmatmul.mubr.f32.gmra.mrb[0].mxu0 %v331
    %v479 = vpop.f32.mrb[0].mxu0
    %v480 = vadd.f32 %v367, %v479
    %v481 = vpop.f32.mrb[0].mxu0
    %482 = vmatprep.mubr.f32.mxu0 0.0
    %483 = vmatmul.mubr.f32.gmra.mrb[0].mxu0 %v332
    %v484 = vpop.f32.mrb[0].mxu0
    %v485 = vadd.f32 %v367, %v484
    %v486 = vpop.f32.mrb[0].mxu0
    %487 = vmatprep.mubr.f32.mxu0 0.0
    %488 = vmatmul.mubr.f32.gmra.mrb[0].mxu0 %v333
    %v489 = vpop.f32.mrb[0].mxu0
    %v490 = vadd.f32 %v367, %v489
    %v491 = vpop.f32.mrb[0].mxu0
    %492 = vmatprep.mubr.f32.mxu0 0.0
    %493 = vmatmul.mubr.f32.gmra.mrb[0].mxu0 %v334
    %v494 = vpop.f32.mrb[0].mxu0
    %v495 = vadd.f32 %v367, %v494
    %v496 = vpop.f32.mrb[0].mxu0
    %497 = vmatprep.mubr.f32.mxu0 0.0
    %498 = vmatmul.mubr.f32.gmra.mrb[0].mxu0 %v335
    %v499 = vpop.f32.mrb[0].mxu0
    %v500 = vadd.f32 %v367, %v499
    %v501 = vpop.f32.mrb[0].mxu0
    %502 = vmatprep.mubr.f32.mxu0 0.0
    %503 = vmatmul.mubr.f32.gmra.mrb[0].mxu0 %v336
    %v504 = vpop.f32.mrb[0].mxu0
    %v505 = vadd.f32 %v367, %v504
    %v506 = vpop.f32.mrb[0].mxu0
    %507 = vmatprep.mubr.f32.mxu0 0.0
    %508 = vmatmul.mubr.f32.gmra.mrb[0].mxu0 %v337
    %v509 = vpop.f32.mrb[0].mxu0
    %v510 = vadd.f32 %v367, %v509
    %v511 = vpop.f32.mrb[0].mxu0
    %512 = vmatprep.mubr.f32.mxu0 0.0
    %513 = vmatmul.mubr.f32.gmra.mrb[0].mxu0 %v338
    %v514 = vpop.f32.mrb[0].mxu0
    %v515 = vadd.f32 %v367, %v514
    %v516 = vpop.f32.mrb[0].mxu0
    %517 = vmatprep.mubr.f32.mxu0 0.0
    %518 = vmatmul.mubr.f32.gmra.mrb[0].mxu0 %v339
    %v519 = vpop.f32.mrb[0].mxu0
    %v520 = vadd.f32 %v367, %v519
    %v521 = vpop.f32.mrb[0].mxu0
    %522 = vmatprep.mubr.f32.mxu0 0.0
    %523 = vmatmul.mubr.f32.gmra.mrb[0].mxu0 %v340
    %v524 = vpop.f32.mrb[0].mxu0
    %v525 = vadd.f32 %v367, %v524
    %v526 = vpop.f32.mrb[0].mxu0
    %527 = vmatprep.mubr.f32.mxu0 0.0
    %528 = vmatmul.mubr.f32.gmra.mrb[0].mxu0 %v341
    %v529 = vpop.f32.mrb[0].mxu0
    %v530 = vadd.f32 %v367, %v529
    %v531 = vpop.f32.mrb[0].mxu0
    %532 = vmatprep.mubr.f32.mxu0 0.0
    %533 = vmatmul.mubr.f32.gmra.mrb[0].mxu0 %v342
    %v534 = vpop.f32.mrb[0].mxu0
    %v535 = vadd.f32 %v367, %v534
    %v536 = vpop.f32.mrb[0].mxu0
    %537 = vmatprep.mubr.f32.mxu0 0.0
    %538 = vmatmul.mubr.f32.gmra.mrb[0].mxu0 %v343
    %v539 = vpop.f32.mrb[0].mxu0
    %v540 = vadd.f32 %v367, %v539
    %v541 = vpop.f32.mrb[0].mxu0
    %542 = vmatprep.mubr.f32.mxu0 0.0
    %543 = vmatmul.mubr.f32.gmra.mrb[0].mxu0 %v344
    %v544 = vpop.f32.mrb[0].mxu0
    %v545 = vadd.f32 %v367, %v544
    %v546 = vpop.f32.mrb[0].mxu0
    %547 = vmatprep.mubr.f32.mxu0 0.0
    %548 = vmatmul.mubr.f32.gmra.mrb[0].mxu0 %v345
    %v549 = vpop.f32.mrb[0].mxu0
    %v550 = vadd.f32 %v367, %v549
    %v551 = vpop.f32.mrb[0].mxu0
    %552 = vmatprep.mubr.f32.mxu0 0.0
    %553 = vmatmul.mubr.f32.gmra.mrb[0].mxu0 %v346
    %v554 = vpop.f32.mrb[0].mxu0
    %v555 = vadd.f32 %v367, %v554
    %v556 = vpop.f32.mrb[0].mxu0
    %557 = vdwg.mxu0
    %v558 = vmax.f32 %v435, 0.0
    %v559 = vmax.f32 %v440, 0.0
    %v560 = vmax.f32 %v445, 0.0
    %v561 = vmax.f32 %v450, 0.0
    %v562 = vmax.f32 %v455, 0.0
    %v563 = vmax.f32 %v460, 0.0
    %v564 = vmax.f32 %v465, 0.0
    %v565 = vmax.f32 %v470, 0.0
    %v566 = vmax.f32 %v475, 0.0
    %v567 = vmax.f32 %v480, 0.0
    %v568 = vmax.f32 %v485, 0.0
    %v569 = vmax.f32 %v490, 0.0
    %v570 = vmax.f32 %v495, 0.0
    %v571 = vmax.f32 %v500, 0.0
    %v572 = vmax.f32 %v505, 0.0
    %v573 = vmax.f32 %v510, 0.0
    %v574 = vmax.f32 %v515, 0.0
    %v575 = vmax.f32 %v520, 0.0
    %v576 = vmax.f32 %v525, 0.0
    %v577 = vmax.f32 %v530, 0.0
    %v578 = vmax.f32 %v535, 0.0
    %v579 = vmax.f32 %v540, 0.0
    %v580 = vmax.f32 %v545, 0.0
    %v581 = vmax.f32 %v550, 0.0
    %v582 = vmax.f32 %v555, 0.0
    %v583 = vld [vmem:[#allocation2 + $0x98] sm:$0xff]
    %v584 = vld [vmem:[#allocation2 + $0xa0] sm:$0xff]
    %v585 = vld [vmem:[#allocation2 + $0xa8] sm:$0xff]
    %v586 = vld [vmem:[#allocation2 + $0xb0] sm:$0xff]
    %v587 = vld [vmem:[#allocation2 + $0xb8] sm:$0xff]
    %v588 = vld [vmem:[#allocation2 + $0xc0] sm:$0xff]
    %v589 = vld [vmem:[#allocation2 + $0xc8] sm:$0xff]
    %v590 = vld [vmem:[#allocation2 + $0xd0] sm:$0xff]
    %v591 = vld [vmem:[#allocation2 + $0xd8] sm:$0xff]
    %v592 = vld [vmem:[#allocation2 + $0xe0] sm:$0xff]
    %v593 = vld [vmem:[#allocation2 + $0xe8] sm:$0xff]
    %v594 = vld [vmem:[#allocation2 + $0xf0] sm:$0xff]
    %v595 = vld [vmem:[#allocation2 + $0xf8] sm:$0xff]
    %v596 = vld [vmem:[#allocation2 + $0x100] sm:$0xff]
    %v597 = vld [vmem:[#allocation2 + $0x108] sm:$0xff]
    %v598 = vld [vmem:[#allocation2 + $0x110] sm:$0xff]
    %v599 = vld [vmem:[#allocation2 + $0x118] sm:$0x1]
    %v600 = vlaneseq
    %v601 = vshrl.u32 %v600, 7
    %v602 = vsub.s32 0, %v601
    %v603 = vrot.slane %v599, %v602
    %604 = vmatprep.subr.mxu0 0.0
    %605 = vmatpush1.msra.mxu0 %v583
    %606 = vmatprep.subr.mxu0 0.0
    %607 = vmatpush1.msra.mxu0 %v584
    %608 = vmatprep.subr.mxu0 0.0
    %609 = vmatpush1.msra.mxu0 %v585
    %610 = vmatprep.subr.mxu0 0.0
    %611 = vmatpush1.msra.mxu0 %v586
    %612 = vmatprep.subr.mxu0 0.0
    %613 = vmatpush1.msra.mxu0 %v587
    %614 = vmatprep.subr.mxu0 0.0
    %615 = vmatpush1.msra.mxu0 %v588
    %616 = vmatprep.subr.mxu0 0.0
    %617 = vmatpush1.msra.mxu0 %v589
    %618 = vmatprep.subr.mxu0 0.0
    %619 = vmatpush1.msra.mxu0 %v590
    %620 = vmatprep.subr.mxu0 0.0
    %621 = vmatpush1.msra.mxu0 %v591
    %622 = vmatprep.subr.mxu0 0.0
    %623 = vmatpush1.msra.mxu0 %v592
    %624 = vmatprep.subr.mxu0 0.0
    %625 = vmatpush1.msra.mxu0 %v593
    %626 = vmatprep.subr.mxu0 0.0
    %627 = vmatpush1.msra.mxu0 %v594
    %628 = vmatprep.subr.mxu0 0.0
    %629 = vmatpush1.msra.mxu0 %v595
    %630 = vmatprep.subr.mxu0 0.0
    %631 = vmatpush1.msra.mxu0 %v596
    %632 = vmatprep.subr.mxu0 0.0
    %633 = vmatpush1.msra.mxu0 %v597
    %634 = vmatprep.subr.mxu0 0.0
    %635 = vmatpush1.msra.mxu0 %v598
    %636 = vmatprep.subr.mxu0 0.0
    %637 = vmatpush1.msra.mxu0 0.0
    %638 = vmatprep.subr.mxu0 0.0
    %639 = vmatpush1.msra.mxu0 0.0
    %640 = vmatprep.subr.mxu0 0.0
    %641 = vmatpush1.msra.mxu0 0.0
    %642 = vmatprep.subr.mxu0 0.0
    %643 = vmatpush1.msra.mxu0 0.0
    %644 = vmatprep.subr.mxu0 0.0
    %645 = vmatpush1.msra.mxu0 0.0
    %646 = vmatprep.subr.mxu0 0.0
    %647 = vmatpush1.msra.mxu0 0.0
    %648 = vmatprep.subr.mxu0 0.0
    %649 = vmatpush1.msra.mxu0 0.0
    %650 = vmatprep.subr.mxu0 0.0
    %651 = vmatpush1.msra.mxu0 0.0
    %652 = vmatprep.subr.mxu0 0.0
    %653 = vmatpush1.msra.mxu0 0.0
    %654 = vmatprep.subr.mxu0 0.0
    %655 = vmatpush1.msra.mxu0 0.0
    %656 = vmatprep.subr.mxu0 0.0
    %657 = vmatpush1.msra.mxu0 0.0
    %658 = vmatprep.subr.mxu0 0.0
    %659 = vmatpush1.msra.mxu0 0.0
    %660 = vmatprep.subr.mxu0 0.0
    %661 = vmatpush1.msra.mxu0 0.0
    %662 = vmatprep.subr.mxu0 0.0
    %663 = vmatpush1.msra.mxu0 0.0
    %664 = vmatprep.subr.mxu0 0.0
    %665 = vmatpush1.msra.mxu0 0.0
    %666 = vmatprep.subr.mxu0 0.0
    %667 = vmatpush1.msra.mxu0 0.0
    %668 = vmatprep.mubr.f32.mxu0 0.0
    %669 = vmatmul.mubr.f32.gmra.mrb[0].mxu0 %v558
    %v670 = vpop.f32.mrb[0].mxu0
    %v671 = vadd.f32 %v603, %v670
    %v672 = vpop.f32.mrb[0].mxu0
    %673 = vmatprep.mubr.f32.mxu0 0.0
    %674 = vmatmul.mubr.f32.gmra.mrb[0].mxu0 %v559
    %v675 = vpop.f32.mrb[0].mxu0
    %v676 = vadd.f32 %v603, %v675
    %v677 = vpop.f32.mrb[0].mxu0
    %678 = vmatprep.mubr.f32.mxu0 0.0
    %679 = vmatmul.mubr.f32.gmra.mrb[0].mxu0 %v560
    %v680 = vpop.f32.mrb[0].mxu0
    %v681 = vadd.f32 %v603, %v680
    %v682 = vpop.f32.mrb[0].mxu0
    %683 = vmatprep.mubr.f32.mxu0 0.0
    %684 = vmatmul.mubr.f32.gmra.mrb[0].mxu0 %v561
    %v685 = vpop.f32.mrb[0].mxu0
    %v686 = vadd.f32 %v603, %v685
    %v687 = vpop.f32.mrb[0].mxu0
    %688 = vmatprep.mubr.f32.mxu0 0.0
    %689 = vmatmul.mubr.f32.gmra.mrb[0].mxu0 %v562
    %v690 = vpop.f32.mrb[0].mxu0
    %v691 = vadd.f32 %v603, %v690
    %v692 = vpop.f32.mrb[0].mxu0
    %693 = vmatprep.mubr.f32.mxu0 0.0
    %694 = vmatmul.mubr.f32.gmra.mrb[0].mxu0 %v563
    %v695 = vpop.f32.mrb[0].mxu0
    %v696 = vadd.f32 %v603, %v695
    %v697 = vpop.f32.mrb[0].mxu0
    %698 = vmatprep.mubr.f32.mxu0 0.0
    %699 = vmatmul.mubr.f32.gmra.mrb[0].mxu0 %v564
    %v700 = vpop.f32.mrb[0].mxu0
    %v701 = vadd.f32 %v603, %v700
    %v702 = vpop.f32.mrb[0].mxu0
    %703 = vmatprep.mubr.f32.mxu0 0.0
    %704 = vmatmul.mubr.f32.gmra.mrb[0].mxu0 %v565
    %v705 = vpop.f32.mrb[0].mxu0
    %v706 = vadd.f32 %v603, %v705
    %v707 = vpop.f32.mrb[0].mxu0
    %708 = vmatprep.mubr.f32.mxu0 0.0
    %709 = vmatmul.mubr.f32.gmra.mrb[0].mxu0 %v566
    %v710 = vpop.f32.mrb[0].mxu0
    %v711 = vadd.f32 %v603, %v710
    %v712 = vpop.f32.mrb[0].mxu0
    %713 = vmatprep.mubr.f32.mxu0 0.0
    %714 = vmatmul.mubr.f32.gmra.mrb[0].mxu0 %v567
    %v715 = vpop.f32.mrb[0].mxu0
    %v716 = vadd.f32 %v603, %v715
    %v717 = vpop.f32.mrb[0].mxu0
    %718 = vmatprep.mubr.f32.mxu0 0.0
    %719 = vmatmul.mubr.f32.gmra.mrb[0].mxu0 %v568
    %v720 = vpop.f32.mrb[0].mxu0
    %v721 = vadd.f32 %v603, %v720
    %v722 = vpop.f32.mrb[0].mxu0
    %723 = vmatprep.mubr.f32.mxu0 0.0
    %724 = vmatmul.mubr.f32.gmra.mrb[0].mxu0 %v569
    %v725 = vpop.f32.mrb[0].mxu0
    %v726 = vadd.f32 %v603, %v725
    %v727 = vpop.f32.mrb[0].mxu0
    %728 = vmatprep.mubr.f32.mxu0 0.0
    %729 = vmatmul.mubr.f32.gmra.mrb[0].mxu0 %v570
    %v730 = vpop.f32.mrb[0].mxu0
    %v731 = vadd.f32 %v603, %v730
    %v732 = vpop.f32.mrb[0].mxu0
    %733 = vmatprep.mubr.f32.mxu0 0.0
    %734 = vmatmul.mubr.f32.gmra.mrb[0].mxu0 %v571
    %v735 = vpop.f32.mrb[0].mxu0
    %v736 = vadd.f32 %v603, %v735
    %v737 = vpop.f32.mrb[0].mxu0
    %738 = vmatprep.mubr.f32.mxu0 0.0
    %739 = vmatmul.mubr.f32.gmra.mrb[0].mxu0 %v572
    %v740 = vpop.f32.mrb[0].mxu0
    %v741 = vadd.f32 %v603, %v740
    %v742 = vpop.f32.mrb[0].mxu0
    %743 = vmatprep.mubr.f32.mxu0 0.0
    %744 = vmatmul.mubr.f32.gmra.mrb[0].mxu0 %v573
    %v745 = vpop.f32.mrb[0].mxu0
    %v746 = vadd.f32 %v603, %v745
    %v747 = vpop.f32.mrb[0].mxu0
    %748 = vmatprep.mubr.f32.mxu0 0.0
    %749 = vmatmul.mubr.f32.gmra.mrb[0].mxu0 %v574
    %v750 = vpop.f32.mrb[0].mxu0
    %v751 = vadd.f32 %v603, %v750
    %v752 = vpop.f32.mrb[0].mxu0
    %753 = vmatprep.mubr.f32.mxu0 0.0
    %754 = vmatmul.mubr.f32.gmra.mrb[0].mxu0 %v575
    %v755 = vpop.f32.mrb[0].mxu0
    %v756 = vadd.f32 %v603, %v755
    %v757 = vpop.f32.mrb[0].mxu0
    %758 = vmatprep.mubr.f32.mxu0 0.0
    %759 = vmatmul.mubr.f32.gmra.mrb[0].mxu0 %v576
    %v760 = vpop.f32.mrb[0].mxu0
    %v761 = vadd.f32 %v603, %v760
    %v762 = vpop.f32.mrb[0].mxu0
    %763 = vmatprep.mubr.f32.mxu0 0.0
    %764 = vmatmul.mubr.f32.gmra.mrb[0].mxu0 %v577
    %v765 = vpop.f32.mrb[0].mxu0
    %v766 = vadd.f32 %v603, %v765
    %v767 = vpop.f32.mrb[0].mxu0
    %768 = vmatprep.mubr.f32.mxu0 0.0
    %769 = vmatmul.mubr.f32.gmra.mrb[0].mxu0 %v578
    %v770 = vpop.f32.mrb[0].mxu0
    %v771 = vadd.f32 %v603, %v770
    %v772 = vpop.f32.mrb[0].mxu0
    %773 = vmatprep.mubr.f32.mxu0 0.0
    %774 = vmatmul.mubr.f32.gmra.mrb[0].mxu0 %v579
    %v775 = vpop.f32.mrb[0].mxu0
    %v776 = vadd.f32 %v603, %v775
    %v777 = vpop.f32.mrb[0].mxu0
    %778 = vmatprep.mubr.f32.mxu0 0.0
    %779 = vmatmul.mubr.f32.gmra.mrb[0].mxu0 %v580
    %v780 = vpop.f32.mrb[0].mxu0
    %v781 = vadd.f32 %v603, %v780
    %v782 = vpop.f32.mrb[0].mxu0
    %783 = vmatprep.mubr.f32.mxu0 0.0
    %784 = vmatmul.mubr.f32.gmra.mrb[0].mxu0 %v581
    %v785 = vpop.f32.mrb[0].mxu0
    %v786 = vadd.f32 %v603, %v785
    %v787 = vpop.f32.mrb[0].mxu0
    %788 = vmatprep.mubr.f32.mxu0 0.0
    %789 = vmatmul.mubr.f32.gmra.mrb[0].mxu0 %v582
    %v790 = vpop.f32.mrb[0].mxu0
    %v791 = vadd.f32 %v603, %v790
    %v792 = vpop.f32.mrb[0].mxu0
    %793 = vdwg.mxu0
    %794 = vst [vmem:[%s2] sm:$0xff] %v671
    %795 = vst [vmem:[%s2 + $0x8] sm:$0xff] %v676
    %796 = vst [vmem:[%s2 + $0x10] sm:$0xff] %v681
    %797 = vst [vmem:[%s2 + $0x18] sm:$0xff] %v686
    %798 = vst [vmem:[%s2 + $0x20] sm:$0xff] %v691
    %799 = vst [vmem:[%s2 + $0x28] sm:$0xff] %v696
    %800 = vst [vmem:[%s2 + $0x30] sm:$0xff] %v701
    %801 = vst [vmem:[%s2 + $0x38] sm:$0xff] %v706
    %802 = vst [vmem:[%s2 + $0x40] sm:$0xff] %v711
    %803 = vst [vmem:[%s2 + $0x48] sm:$0xff] %v716
    %804 = vst [vmem:[%s2 + $0x50] sm:$0xff] %v721
    %805 = vst [vmem:[%s2 + $0x58] sm:$0xff] %v726
    %806 = vst [vmem:[%s2 + $0x60] sm:$0xff] %v731
    %807 = vst [vmem:[%s2 + $0x68] sm:$0xff] %v736
    %808 = vst [vmem:[%s2 + $0x70] sm:$0xff] %v741
    %809 = vst [vmem:[%s2 + $0x78] sm:$0xff] %v746
    %810 = vst [vmem:[%s2 + $0x80] sm:$0xff] %v751
    %811 = vst [vmem:[%s2 + $0x88] sm:$0xff] %v756
    %812 = vst [vmem:[%s2 + $0x90] sm:$0xff] %v761
    %813 = vst [vmem:[%s2 + $0x98] sm:$0xff] %v766
    %814 = vst [vmem:[%s2 + $0xa0] sm:$0xff] %v771
    %815 = vst [vmem:[%s2 + $0xa8] sm:$0xff] %v776
    %816 = vst [vmem:[%s2 + $0xb0] sm:$0xff] %v781
    %817 = vst [vmem:[%s2 + $0xb8] sm:$0xff] %v786
    %818 = vst [vmem:[%s2 + $0xc0] sm:$0xff] %v791
    // Predicated region
    $region14: #{dnn_forward.1} parent=1 // pred_check
      _
    $region15: #{dnn_forward.1} parent=1 // pred_check_branch
      %820 = sbr.rel (0) target = $region17
    $region16: #{dnn_forward.1} parent=1 // pred_region
      _
    $region17: #{dnn_forward.1} parent=1 // pred_fallthru
      _
    // Predicated region
    $region18: #{dnn_forward.1} parent=1 // pred_check
      _
    $region19: #{dnn_forward.1} parent=1 // pred_check_branch
      %822 = sbr.rel (0) target = $region21
    $region20: #{dnn_forward.1} parent=1 // pred_region
      _
    $region21: #{dnn_forward.1} parent=1 // pred_fallthru
      _
    %823 = vsyncpa [#allocation3], 1

</llo_original>
